<compile_context>
chip_gen: v7x
topology: tpu7x:2x2x1
jax: 0.10.0
libtpu: 0.0.40
codegen_flags: <defaults>
</compile_context>

<pallas_src>
import math

import jax
import jax.numpy as jnp
from jax.experimental import pallas as pl
from jax.experimental.pallas import tpu as pltpu


# ----------------------------- Pallas kernel -----------------------------

def _ca_kernel(x_ref, w_ref, bsq_ref, o_ref):
    """Fused CA forward for one block of images.

    x_ref  : (B, C, HW)      input, native dtype (C on sublanes, HW on lanes)
    w_ref  : (C, 2*Csq + 1)  [Wsq^T | Wex | 2*b_ex]  (f32)
    bsq_ref: (1, Csq)        squeeze bias row        (f32)
    o_ref  : (B, C, HW)      output, same dtype as x
    """
    B, C, HW = x_ref.shape
    Csq = bsq_ref.shape[1]

    # Parameter slab: loaded once, reused for every image in the block.
    wsq_t = w_ref[:, 0:Csq]                   # (C, Csq)  = Wsq^T
    wex = w_ref[:, Csq:2 * Csq]               # (C, Csq)  = Wex
    bex2 = w_ref[:, 2 * Csq:2 * Csq + 1]      # (C, 1)    = 2 * b_ex
    bsq = bsq_ref[...]                        # (1, Csq)

    inv_hw = 1.0 / HW

    for b in range(B):                        # static loop: whole block in one grid step
        xb = x_ref[b].astype(jnp.float32)                       # (C, HW)

        # AdaptiveAvgPool2d(1) / AdaptiveMaxPool2d(1): per-channel lane
        # reductions (exact f32).
        z_avg = jnp.sum(xb, axis=1, keepdims=True) * inv_hw     # (C, 1)
        z_max = jnp.max(xb, axis=1, keepdims=True)              # (C, 1)

        # Conv_Squeeze (1x1 conv + bias + ReLU) on both pooled vectors.
        # s[o] = sum_c Wsq[o,c] * z[c] done as broadcast-multiply + sublane
        # reduce: exact f32, and a shorter dependent tail than an MXU push/pop.
        s_avg = jnp.sum(wsq_t * z_avg, axis=0, keepdims=True) + bsq   # (1, Csq)
        s_max = jnp.sum(wsq_t * z_max, axis=0, keepdims=True) + bsq   # (1, Csq)
        s = jnp.maximum(s_avg, 0.0) + jnp.maximum(s_max, 0.0)         # (1, Csq)

        # Conv_Excitation on both paths, summed:
        #   (Wex s_avg + b) + (Wex s_max + b) == Wex (s_avg + s_max) + 2b
        e = jnp.sum(wex * s, axis=1, keepdims=True) + bex2            # (C, 1)

        # Sigmoid gate (exp on the EUP; exact reciprocal -- approx=True is a
        # drop-in if tolerance allows).
        gate = pl.reciprocal(1.0 + jnp.exp(-e), approx=False)         # (C, 1)

        # Re-read x from VMEM for the apply so the (C, HW) tile is not held
        # live across the gate computation.
        o_ref[b] = (x_ref[b].astype(jnp.float32) * gate).astype(o_ref.dtype)


# ----------------------------- wrapper -----------------------------

def ca_forward(x_nchw, params, *, split_batch_across_cores=False):
    """CA.forward: U * sigmoid(Exc(Sq(avg(U))) + Exc(Sq(max(U)))), NCHW in/out."""
    w, bsq = params["w"], params["bsq"]
    B, C, H, W = x_nchw.shape
    Csq = bsq.shape[1]
    HW = H * W

    # NCHW -> (B, C, H*W) is a free row-major reshape (no transpose, no extra
    # HBM pass); x keeps its native dtype all the way through the kernel DMAs.
    x = x_nchw.reshape(B, C, HW)

    if split_batch_across_cores and B % 2 == 0:
        # v7x (2 TensorCores/chip): split the batch across cores. Plain
        # "parallel" does not change core assignment; CORE_PARALLEL does.
        grid = (2,)
        blk_b = B // 2
        semantics = (pltpu.CORE_PARALLEL,)
    else:
        # v5e / v6e (single TensorCore): one grid step over the whole tensor
        # minimises the per-step fixed overhead that dominates at 16x16.
        grid = (1,)
        blk_b = B
        semantics = ("arbitrary",)

    x_spec = pl.BlockSpec((blk_b, C, HW), lambda i: (i, 0, 0))

    out = pl.pallas_call(
        _ca_kernel,
        out_shape=jax.ShapeDtypeStruct((B, C, HW), x_nchw.dtype),
        grid=grid,
        in_specs=[
            x_spec,
            pl.BlockSpec((C, 2 * Csq + 1), lambda i: (0, 0)),   # packed weight slab
            pl.BlockSpec((1, Csq), lambda i: (0, 0)),           # squeeze bias row
        ],
        out_specs=x_spec,
        compiler_params=pltpu.CompilerParams(dimension_semantics=semantics),
    )(x, w, bsq)

    return out.reshape(B, C, H, W)            # free reshape back to NCHW


# ----------------------------- parameters -----------------------------

def init_params(key, in_channels, dtype=jnp.float32):
    """Synthetic parameters matching CA.__init__ (PyTorch 1x1-conv layouts), packed."""
    csq = in_channels // 16
    k1, k2, k3, k4 = jax.random.split(key, 4)
    # PyTorch layouts: Conv_Squeeze weight (Csq, C, 1, 1); Conv_Excitation (C, Csq, 1, 1).
    w_sq = jax.random.normal(k1, (csq, in_channels), dtype) / math.sqrt(in_channels)
    b_sq = 0.1 * jax.random.normal(k2, (csq,), dtype)
    w_ex = jax.random.normal(k3, (in_channels, csq), dtype) / math.sqrt(max(csq, 1))
    b_ex = 0.1 * jax.random.normal(k4, (in_channels,), dtype)
    # One lane-friendly slab with channels on sublanes:
    #   [:, 0:Csq]      = Wsq^T
    #   [:, Csq:2*Csq]  = Wex
    #   [:, 2*Csq]      = 2 * b_ex   (pre-doubled: gate uses Exc(s1)+Exc(s2))
    w = jnp.concatenate([w_sq.T, w_ex, 2.0 * b_ex[:, None]], axis=1).astype(jnp.float32)
    return {"w": w, "bsq": b_sq.reshape(1, csq).astype(jnp.float32)}


# ----------------------------- pure-JAX reference -----------------------------

def ca_reference(x_nchw, params):
    w, bsq = params["w"], params["bsq"]
    C = w.shape[0]
    Csq = bsq.shape[1]
    wsq_t = w[:, :Csq]          # (C, Csq) = Wsq^T
    wex = w[:, Csq:2 * Csq]     # (C, Csq)
    bex2 = w[:, 2 * Csq]        # (C,)     = 2 * b_ex

    x = x_nchw.astype(jnp.float32)
    z1 = jnp.mean(x, axis=(2, 3))                    # (B, C)  avg pool
    z2 = jnp.max(x, axis=(2, 3))                     # (B, C)  max pool

    hi = jax.lax.Precision.HIGHEST

    def squeeze(z):                                  # Conv_Squeeze + ReLU
        return jnp.maximum(jnp.dot(z, wsq_t, precision=hi) + bsq, 0.0)

    s = squeeze(z1) + squeeze(z2)                    # (B, Csq)
    e = jnp.dot(s, wex.T, precision=hi) + bex2       # (B, C)
    gate = jax.nn.sigmoid(e)
    return (x * gate[:, :, None, None]).astype(x_nchw.dtype)


# ----------------------------- main -----------------------------

if __name__ == "__main__":
    key = jax.random.PRNGKey(0)
    kx, kp = jax.random.split(key)

    # in_channels must be a multiple of 16 (Conv_Squeeze uses C // 16).
    B, C, H, W = 2, 128, 16, 16
    params = init_params(kp, C)
    ca = jax.jit(ca_forward)

    # f32 (PyTorch default dtype) -- kernel preserves the caller's dtype.
    x = jax.random.normal(kx, (B, C, H, W), jnp.float32)     # PyTorch-style NCHW
    out = jax.block_until_ready(ca(x, params))
    ref = ca_reference(x, params)
    assert out.shape == (B, C, H, W) and out.dtype == x.dtype
    assert bool(jnp.all(jnp.isfinite(out)))
    assert bool(jnp.allclose(out, ref, rtol=1e-4, atol=1e-4)), \
        float(jnp.max(jnp.abs(out - ref)))

    # Native bf16 I/O path (halves DMA bytes; math stays f32 inside the kernel).
    x16 = x.astype(jnp.bfloat16)
    out16 = jax.block_until_ready(ca(x16, params))
    ref16 = ca_reference(x16, params)
    assert out16.dtype == jnp.bfloat16
    assert bool(jnp.allclose(out16.astype(jnp.float32), ref16.astype(jnp.float32),
                             rtol=2e-2, atol=2e-2))

    print("KERNEL_OK")
</pallas_src>

<mosaic_0001>
module attributes {stable_mosaic.version = 11 : i64} {
  func.func @_ca_kernel(%arg0: i32, %arg1: memref<2x128x256xf32, #tpu.memory_space<vmem>>, %arg2: memref<128x17xf32, #tpu.memory_space<vmem>>, %arg3: memref<1x8xf32, #tpu.memory_space<vmem>>, %arg4: memref<2x128x256xf32, #tpu.memory_space<vmem>>) attributes {dimension_semantics = [#tpu.dimension_semantics<arbitrary>], iteration_bounds = array<i64: 1>, scalar_prefetch = 0 : i64, scratch_operands = 0 : i64, tpu.core_type = #tpu.core_type<tc>, window_params = [{transform_indices = @transform_0, window_bounds = array<i64: 2, 128, 256>}, {pipeline_mode = #tpu.pipeline_mode<synchronous>, transform_indices = @transform_1, window_bounds = array<i64: 128, 17>}, {pipeline_mode = #tpu.pipeline_mode<synchronous>, transform_indices = @transform_2, window_bounds = array<i64: 1, 8>}, {transform_indices = @transform_3, window_bounds = array<i64: 2, 128, 256>}]} {
    %c0 = arith.constant 0 : index
    %c0_0 = arith.constant 0 : index
    %0 = vector.load %arg2[%c0, %c0_0] : memref<128x17xf32, #tpu.memory_space<vmem>>, vector<128x8xf32>
    %c0_1 = arith.constant 0 : index
    %c8 = arith.constant 8 : index
    %1 = vector.load %arg2[%c0_1, %c8] : memref<128x17xf32, #tpu.memory_space<vmem>>, vector<128x8xf32>
    %c0_2 = arith.constant 0 : index
    %c16 = arith.constant 16 : index
    %2 = vector.load %arg2[%c0_2, %c16] : memref<128x17xf32, #tpu.memory_space<vmem>>, vector<128x1xf32>
    %c0_3 = arith.constant 0 : index
    %c0_4 = arith.constant 0 : index
    %3 = vector.load %arg3[%c0_3, %c0_4] : memref<1x8xf32, #tpu.memory_space<vmem>>, vector<1x8xf32>
    %c0_5 = arith.constant 0 : index
    %c0_6 = arith.constant 0 : index
    %c0_7 = arith.constant 0 : index
    %4 = vector.load %arg1[%c0_5, %c0_6, %c0_7] : memref<2x128x256xf32, #tpu.memory_space<vmem>>, vector<1x128x256xf32>
    %5 = vector.shape_cast %4 : vector<1x128x256xf32> to vector<128x256xf32>
    %cst = arith.constant dense<0.000000e+00> : vector<128xf32>
    %6 = vector.multi_reduction <add>, %5, %cst [1] : vector<128x256xf32> to vector<128xf32>
    %7 = vector.shape_cast %6 : vector<128xf32> to vector<128x1xf32>
    %cst_8 = arith.constant 3.906250e-03 : f32
    %8 = vector.broadcast %cst_8 : f32 to vector<128x1xf32>
    %9 = arith.mulf %7, %8 : vector<128x1xf32>
    %cst_9 = arith.constant dense<0xFF800000> : vector<128xf32>
    %10 = vector.multi_reduction <maximumf>, %5, %cst_9 [1] : vector<128x256xf32> to vector<128xf32>
    %11 = vector.shape_cast %10 : vector<128xf32> to vector<128x1xf32>
    %12 = vector.broadcast %9 : vector<128x1xf32> to vector<128x8xf32>
    %13 = arith.mulf %0, %12 : vector<128x8xf32>
    %cst_10 = arith.constant dense<0.000000e+00> : vector<8xf32>
    %14 = vector.multi_reduction <add>, %13, %cst_10 [0] : vector<128x8xf32> to vector<8xf32>
    %15 = vector.shape_cast %14 : vector<8xf32> to vector<1x8xf32>
    %16 = arith.addf %15, %3 : vector<1x8xf32>
    %17 = vector.broadcast %11 : vector<128x1xf32> to vector<128x8xf32>
    %18 = arith.mulf %0, %17 : vector<128x8xf32>
    %cst_11 = arith.constant dense<0.000000e+00> : vector<8xf32>
    %19 = vector.multi_reduction <add>, %18, %cst_11 [0] : vector<128x8xf32> to vector<8xf32>
    %20 = vector.shape_cast %19 : vector<8xf32> to vector<1x8xf32>
    %21 = arith.addf %20, %3 : vector<1x8xf32>
    %cst_12 = arith.constant 0.000000e+00 : f32
    %22 = vector.broadcast %cst_12 : f32 to vector<1x8xf32>
    %23 = arith.maximumf %16, %22 : vector<1x8xf32>
    %cst_13 = arith.constant 0.000000e+00 : f32
    %24 = vector.broadcast %cst_13 : f32 to vector<1x8xf32>
    %25 = arith.maximumf %21, %24 : vector<1x8xf32>
    %26 = arith.addf %23, %25 : vector<1x8xf32>
    %27 = vector.broadcast %26 : vector<1x8xf32> to vector<128x8xf32>
    %28 = arith.mulf %1, %27 : vector<128x8xf32>
    %cst_14 = arith.constant dense<0.000000e+00> : vector<128xf32>
    %29 = vector.multi_reduction <add>, %28, %cst_14 [1] : vector<128x8xf32> to vector<128xf32>
    %30 = vector.shape_cast %29 : vector<128xf32> to vector<128x1xf32>
    %31 = arith.addf %30, %2 : vector<128x1xf32>
    %cst_15 = arith.constant 0.000000e+00 : f32
    %32 = vector.broadcast %cst_15 : f32 to vector<128x1xf32>
    %33 = arith.subf %32, %31 : vector<128x1xf32>
    %34 = math.exp %33 : vector<128x1xf32>
    %cst_16 = arith.constant 1.000000e+00 : f32
    %35 = vector.broadcast %cst_16 : f32 to vector<128x1xf32>
    %36 = arith.addf %35, %34 : vector<128x1xf32>
    %37 = tpu.reciprocal %36 : vector<128x1xf32> -> vector<128x1xf32>
    %c0_17 = arith.constant 0 : index
    %c0_18 = arith.constant 0 : index
    %c0_19 = arith.constant 0 : index
    %38 = vector.load %arg1[%c0_17, %c0_18, %c0_19] : memref<2x128x256xf32, #tpu.memory_space<vmem>>, vector<1x128x256xf32>
    %39 = vector.shape_cast %38 : vector<1x128x256xf32> to vector<128x256xf32>
    %40 = vector.broadcast %37 : vector<128x1xf32> to vector<128x256xf32>
    %41 = arith.mulf %39, %40 : vector<128x256xf32>
    %c0_20 = arith.constant 0 : index
    %c0_21 = arith.constant 0 : index
    %c0_22 = arith.constant 0 : index
    %42 = vector.load %arg4[%c0_20, %c0_21, %c0_22] : memref<2x128x256xf32, #tpu.memory_space<vmem>>, vector<1x128x256xf32>
    %43 = vector.shape_cast %42 : vector<1x128x256xf32> to vector<128x256xf32>
    %44 = vector.shape_cast %41 : vector<128x256xf32> to vector<1x128x256xf32>
    tpu.vector_store %arg4[%c0_20, %c0_21, %c0_22], %44 {strides = array<i32>} : memref<2x128x256xf32, #tpu.memory_space<vmem>>, vector<1x128x256xf32>,
    %c1 = arith.constant 1 : index
    %c0_23 = arith.constant 0 : index
    %c0_24 = arith.constant 0 : index
    %45 = vector.load %arg1[%c1, %c0_23, %c0_24] : memref<2x128x256xf32, #tpu.memory_space<vmem>>, vector<1x128x256xf32>
    %46 = vector.shape_cast %45 : vector<1x128x256xf32> to vector<128x256xf32>
    %cst_25 = arith.constant dense<0.000000e+00> : vector<128xf32>
    %47 = vector.multi_reduction <add>, %46, %cst_25 [1] : vector<128x256xf32> to vector<128xf32>
    %48 = vector.shape_cast %47 : vector<128xf32> to vector<128x1xf32>
    %cst_26 = arith.constant 3.906250e-03 : f32
    %49 = vector.broadcast %cst_26 : f32 to vector<128x1xf32>
    %50 = arith.mulf %48, %49 : vector<128x1xf32>
    %cst_27 = arith.constant dense<0xFF800000> : vector<128xf32>
    %51 = vector.multi_reduction <maximumf>, %46, %cst_27 [1] : vector<128x256xf32> to vector<128xf32>
    %52 = vector.shape_cast %51 : vector<128xf32> to vector<128x1xf32>
    %53 = vector.broadcast %50 : vector<128x1xf32> to vector<128x8xf32>
    %54 = arith.mulf %0, %53 : vector<128x8xf32>
    %cst_28 = arith.constant dense<0.000000e+00> : vector<8xf32>
    %55 = vector.multi_reduction <add>, %54, %cst_28 [0] : vector<128x8xf32> to vector<8xf32>
    %56 = vector.shape_cast %55 : vector<8xf32> to vector<1x8xf32>
    %57 = arith.addf %56, %3 : vector<1x8xf32>
    %58 = vector.broadcast %52 : vector<128x1xf32> to vector<128x8xf32>
    %59 = arith.mulf %0, %58 : vector<128x8xf32>
    %cst_29 = arith.constant dense<0.000000e+00> : vector<8xf32>
    %60 = vector.multi_reduction <add>, %59, %cst_29 [0] : vector<128x8xf32> to vector<8xf32>
    %61 = vector.shape_cast %60 : vector<8xf32> to vector<1x8xf32>
    %62 = arith.addf %61, %3 : vector<1x8xf32>
    %cst_30 = arith.constant 0.000000e+00 : f32
    %63 = vector.broadcast %cst_30 : f32 to vector<1x8xf32>
    %64 = arith.maximumf %57, %63 : vector<1x8xf32>
    %cst_31 = arith.constant 0.000000e+00 : f32
    %65 = vector.broadcast %cst_31 : f32 to vector<1x8xf32>
    %66 = arith.maximumf %62, %65 : vector<1x8xf32>
    %67 = arith.addf %64, %66 : vector<1x8xf32>
    %68 = vector.broadcast %67 : vector<1x8xf32> to vector<128x8xf32>
    %69 = arith.mulf %1, %68 : vector<128x8xf32>
    %cst_32 = arith.constant dense<0.000000e+00> : vector<128xf32>
    %70 = vector.multi_reduction <add>, %69, %cst_32 [1] : vector<128x8xf32> to vector<128xf32>
    %71 = vector.shape_cast %70 : vector<128xf32> to vector<128x1xf32>
    %72 = arith.addf %71, %2 : vector<128x1xf32>
    %cst_33 = arith.constant 0.000000e+00 : f32
    %73 = vector.broadcast %cst_33 : f32 to vector<128x1xf32>
    %74 = arith.subf %73, %72 : vector<128x1xf32>
    %75 = math.exp %74 : vector<128x1xf32>
    %cst_34 = arith.constant 1.000000e+00 : f32
    %76 = vector.broadcast %cst_34 : f32 to vector<128x1xf32>
    %77 = arith.addf %76, %75 : vector<128x1xf32>
    %78 = tpu.reciprocal %77 : vector<128x1xf32> -> vector<128x1xf32>
    %c1_35 = arith.constant 1 : index
    %c0_36 = arith.constant 0 : index
    %c0_37 = arith.constant 0 : index
    %79 = vector.load %arg1[%c1_35, %c0_36, %c0_37] : memref<2x128x256xf32, #tpu.memory_space<vmem>>, vector<1x128x256xf32>
    %80 = vector.shape_cast %79 : vector<1x128x256xf32> to vector<128x256xf32>
    %81 = vector.broadcast %78 : vector<128x1xf32> to vector<128x256xf32>
    %82 = arith.mulf %80, %81 : vector<128x256xf32>
    %c1_38 = arith.constant 1 : index
    %c0_39 = arith.constant 0 : index
    %c0_40 = arith.constant 0 : index
    %83 = vector.load %arg4[%c1_38, %c0_39, %c0_40] : memref<2x128x256xf32, #tpu.memory_space<vmem>>, vector<1x128x256xf32>
    %84 = vector.shape_cast %83 : vector<1x128x256xf32> to vector<128x256xf32>
    %85 = vector.shape_cast %82 : vector<128x256xf32> to vector<1x128x256xf32>
    tpu.vector_store %arg4[%c1_38, %c0_39, %c0_40], %85 {strides = array<i32>} : memref<2x128x256xf32, #tpu.memory_space<vmem>>, vector<1x128x256xf32>,
    return
  }
  func.func @transform_0(%arg0: i32) -> (i32, i32, i32) {
    %c0_i32 = arith.constant 0 : i32
    %c0_i32_0 = arith.constant 0 : i32
    %c0_i32_1 = arith.constant 0 : i32
    return %arg0, %c0_i32, %c0_i32_0 : i32, i32, i32
  }
  func.func @transform_1(%arg0: i32) -> (i32, i32) {
    %c0_i32 = arith.constant 0 : i32
    %c0_i32_0 = arith.constant 0 : i32
    %c0_i32_1 = arith.constant 0 : i32
    return %c0_i32, %c0_i32_0 : i32, i32
  }
  func.func @transform_2(%arg0: i32) -> (i32, i32) {
    %c0_i32 = arith.constant 0 : i32
    %c0_i32_0 = arith.constant 0 : i32
    %c0_i32_1 = arith.constant 0 : i32
    return %c0_i32, %c0_i32_0 : i32, i32
  }
  func.func @transform_3(%arg0: i32) -> (i32, i32, i32) {
    %c0_i32 = arith.constant 0 : i32
    %c0_i32_0 = arith.constant 0 : i32
    %c0_i32_1 = arith.constant 0 : i32
    return %arg0, %c0_i32, %c0_i32_0 : i32, i32, i32
  }
}

</mosaic_0001>

<llo_original>
// kernel: ca_forward.1
$region0: #{ca_forward.1}
  #allocation0 [shape = 'u32[]', space=smem, size = 0x4, offset = 0x4, fixed_abs, tag = 'smem constant byte address 0x4 - core index']
  #allocation1 [shape = 'u32[144,128]{1,0:T(1,128)}', space=vmem, size = 0x12000, scoped, tag = 'internal scratch']
  %s0 = inlined_call_operand.vmem [shape: f32[2,128,256], index: 0, kind: input, shape index: {}]
  %s1 = inlined_call_operand.vmem [shape: f32[128,17], index: 1, kind: input, shape index: {}]
  %s2 = inlined_call_operand.vmem [shape: f32[1,8], index: 2, kind: input, shape index: {}]
  %s3 = inlined_call_operand.vmem [shape: f32[2,128,256], index: 3, kind: output, shape index: {}]
  %s4 = sld [smem:[#allocation0]]
  $region22: #{ca_forward.1} parent=0
    _
  %s6 = ssub.s32 1, %s4
  %s7 = scalar_select 0, %s6, %s4
  // Predicated region
  $region2: #{ca_forward.1} parent=0 // pred_check
    _
  $region3: #{ca_forward.1} parent=0 // pred_check_branch
    %9 = sbr.rel (0) target = $region5
  $region4: #{ca_forward.1} parent=0 // pred_region
    _
  $region5: #{ca_forward.1} parent=0 // pred_fallthru
    _
  // Predicated region
  $region6: #{ca_forward.1} parent=0 // pred_check
    _
  $region7: #{ca_forward.1} parent=0 // pred_check_branch
    %11 = sbr.rel (0) target = $region9
  $region8: #{ca_forward.1} parent=0 // pred_region
    _
  $region9: #{ca_forward.1} parent=0 // pred_fallthru
    _
  // Predicated region
  $region10: #{ca_forward.1} parent=0 // pred_check
    _
  $region11: #{ca_forward.1} parent=0 // pred_check_branch
    %13 = sbr.rel (0) target = $region13
  $region12: #{ca_forward.1} parent=0 // pred_region
    _
  $region13: #{ca_forward.1} parent=0 // pred_fallthru
    _
  %v14 = vld [vmem:[%s1] sm:$0xff]
  %v15 = vld [vmem:[%s1 + $0x8] sm:$0xff]
  %v16 = vld [vmem:[%s1 + $0x10] sm:$0xff]
  %v17 = vld [vmem:[%s1 + $0x18] sm:$0xff]
  %v18 = vld [vmem:[%s1 + $0x20] sm:$0xff]
  %v19 = vld [vmem:[%s1 + $0x28] sm:$0xff]
  %v20 = vld [vmem:[%s1 + $0x30] sm:$0xff]
  %v21 = vld [vmem:[%s1 + $0x38] sm:$0xff]
  %v22 = vld [vmem:[%s1 + $0x40] sm:$0xff]
  %v23 = vld [vmem:[%s1 + $0x48] sm:$0xff]
  %v24 = vld [vmem:[%s1 + $0x50] sm:$0xff]
  %v25 = vld [vmem:[%s1 + $0x58] sm:$0xff]
  %v26 = vld [vmem:[%s1 + $0x60] sm:$0xff]
  %v27 = vld [vmem:[%s1 + $0x68] sm:$0xff]
  %v28 = vld [vmem:[%s1 + $0x70] sm:$0xff]
  %v29 = vld [vmem:[%s1 + $0x78] sm:$0xff]
  %v30 = vld [vmem:[%s2] sm:$0x1]
  %v31 = vld [vmem:[%s0] sm:$0xff]
  %v32 = vld [vmem:[%s0 + $0x8] sm:$0xff]
  %v33 = vld [vmem:[%s0 + $0x10] sm:$0xff]
  %v34 = vld [vmem:[%s0 + $0x18] sm:$0xff]
  %v35 = vld [vmem:[%s0 + $0x20] sm:$0xff]
  %v36 = vld [vmem:[%s0 + $0x28] sm:$0xff]
  %v37 = vld [vmem:[%s0 + $0x30] sm:$0xff]
  %v38 = vld [vmem:[%s0 + $0x38] sm:$0xff]
  %v39 = vld [vmem:[%s0 + $0x40] sm:$0xff]
  %v40 = vld [vmem:[%s0 + $0x48] sm:$0xff]
  %v41 = vld [vmem:[%s0 + $0x50] sm:$0xff]
  %v42 = vld [vmem:[%s0 + $0x58] sm:$0xff]
  %v43 = vld [vmem:[%s0 + $0x60] sm:$0xff]
  %v44 = vld [vmem:[%s0 + $0x68] sm:$0xff]
  %v45 = vld [vmem:[%s0 + $0x70] sm:$0xff]
  %v46 = vld [vmem:[%s0 + $0x78] sm:$0xff]
  %v47 = vld [vmem:[%s0 + $0x80] sm:$0xff]
  %v48 = vld [vmem:[%s0 + $0x88] sm:$0xff]
  %v49 = vld [vmem:[%s0 + $0x90] sm:$0xff]
  %v50 = vld [vmem:[%s0 + $0x98] sm:$0xff]
  %v51 = vld [vmem:[%s0 + $0xa0] sm:$0xff]
  %v52 = vld [vmem:[%s0 + $0xa8] sm:$0xff]
  %v53 = vld [vmem:[%s0 + $0xb0] sm:$0xff]
  %v54 = vld [vmem:[%s0 + $0xb8] sm:$0xff]
  %v55 = vld [vmem:[%s0 + $0xc0] sm:$0xff]
  %v56 = vld [vmem:[%s0 + $0xc8] sm:$0xff]
  %v57 = vld [vmem:[%s0 + $0xd0] sm:$0xff]
  %v58 = vld [vmem:[%s0 + $0xd8] sm:$0xff]
  %v59 = vld [vmem:[%s0 + $0xe0] sm:$0xff]
  %v60 = vld [vmem:[%s0 + $0xe8] sm:$0xff]
  %v61 = vld [vmem:[%s0 + $0xf0] sm:$0xff]
  %v62 = vld [vmem:[%s0 + $0xf8] sm:$0xff]
  %v63 = vadd.f32 %v31, %v32
  %64 = vadd.xlane.f32.xlu0 %v63
  %v65 = vpop.xlane.xlu0 %64
  %v66 = vadd.f32 %v33, %v34
  %67 = vadd.xlane.f32.xlu0 %v66
  %v68 = vpop.xlane.xlu0 %67
  %v69 = vadd.f32 %v35, %v36
  %70 = vadd.xlane.f32.xlu0 %v69
  %v71 = vpop.xlane.xlu0 %70
  %v72 = vadd.f32 %v37, %v38
  %73 = vadd.xlane.f32.xlu0 %v72
  %v74 = vpop.xlane.xlu0 %73
  %v75 = vadd.f32 %v39, %v40
  %76 = vadd.xlane.f32.xlu0 %v75
  %v77 = vpop.xlane.xlu0 %76
  %v78 = vadd.f32 %v41, %v42
  %79 = vadd.xlane.f32.xlu0 %v78
  %v80 = vpop.xlane.xlu0 %79
  %v81 = vadd.f32 %v43, %v44
  %82 = vadd.xlane.f32.xlu0 %v81
  %v83 = vpop.xlane.xlu0 %82
  %v84 = vadd.f32 %v45, %v46
  %85 = vadd.xlane.f32.xlu0 %v84
  %v86 = vpop.xlane.xlu0 %85
  %v87 = vadd.f32 %v47, %v48
  %88 = vadd.xlane.f32.xlu0 %v87
  %v89 = vpop.xlane.xlu0 %88
  %v90 = vadd.f32 %v49, %v50
  %91 = vadd.xlane.f32.xlu0 %v90
  %v92 = vpop.xlane.xlu0 %91
  %v93 = vadd.f32 %v51, %v52
  %94 = vadd.xlane.f32.xlu0 %v93
  %v95 = vpop.xlane.xlu0 %94
  %v96 = vadd.f32 %v53, %v54
  %97 = vadd.xlane.f32.xlu0 %v96
  %v98 = vpop.xlane.xlu0 %97
  %v99 = vadd.f32 %v55, %v56
  %100 = vadd.xlane.f32.xlu0 %v99
  %v101 = vpop.xlane.xlu0 %100
  %v102 = vadd.f32 %v57, %v58
  %103 = vadd.xlane.f32.xlu0 %v102
  %v104 = vpop.xlane.xlu0 %103
  %v105 = vadd.f32 %v59, %v60
  %106 = vadd.xlane.f32.xlu0 %v105
  %v107 = vpop.xlane.xlu0 %106
  %v108 = vadd.f32 %v61, %v62
  %109 = vadd.xlane.f32.xlu0 %v108
  %v110 = vpop.xlane.xlu0 %109
  %v111 = vmul.f32 %v65, 0.00390625
  %v112 = vmul.f32 %v68, 0.00390625
  %v113 = vmul.f32 %v71, 0.00390625
  %v114 = vmul.f32 %v74, 0.00390625
  %v115 = vmul.f32 %v77, 0.00390625
  %v116 = vmul.f32 %v80, 0.00390625
  %v117 = vmul.f32 %v83, 0.00390625
  %v118 = vmul.f32 %v86, 0.00390625
  %v119 = vmul.f32 %v89, 0.00390625
  %v120 = vmul.f32 %v92, 0.00390625
  %v121 = vmul.f32 %v95, 0.00390625
  %v122 = vmul.f32 %v98, 0.00390625
  %v123 = vmul.f32 %v101, 0.00390625
  %v124 = vmul.f32 %v104, 0.00390625
  %v125 = vmul.f32 %v107, 0.00390625
  %v126 = vmul.f32 %v110, 0.00390625
  %v127 = vmax.f32 %v31, %v32
  %128 = vmax.xlane.f32.xlu0 %v127
  %v129 = vpop.xlane.xlu0 %128
  %v130 = vmax.f32 %v33, %v34
  %131 = vmax.xlane.f32.xlu0 %v130
  %v132 = vpop.xlane.xlu0 %131
  %v133 = vmax.f32 %v35, %v36
  %134 = vmax.xlane.f32.xlu0 %v133
  %v135 = vpop.xlane.xlu0 %134
  %v136 = vmax.f32 %v37, %v38
  %137 = vmax.xlane.f32.xlu0 %v136
  %v138 = vpop.xlane.xlu0 %137
  %v139 = vmax.f32 %v39, %v40
  %140 = vmax.xlane.f32.xlu0 %v139
  %v141 = vpop.xlane.xlu0 %140
  %v142 = vmax.f32 %v41, %v42
  %143 = vmax.xlane.f32.xlu0 %v142
  %v144 = vpop.xlane.xlu0 %143
  %v145 = vmax.f32 %v43, %v44
  %146 = vmax.xlane.f32.xlu0 %v145
  %v147 = vpop.xlane.xlu0 %146
  %v148 = vmax.f32 %v45, %v46
  %149 = vmax.xlane.f32.xlu0 %v148
  %v150 = vpop.xlane.xlu0 %149
  %v151 = vmax.f32 %v47, %v48
  %152 = vmax.xlane.f32.xlu0 %v151
  %v153 = vpop.xlane.xlu0 %152
  %v154 = vmax.f32 %v49, %v50
  %155 = vmax.xlane.f32.xlu0 %v154
  %v156 = vpop.xlane.xlu0 %155
  %v157 = vmax.f32 %v51, %v52
  %158 = vmax.xlane.f32.xlu0 %v157
  %v159 = vpop.xlane.xlu0 %158
  %v160 = vmax.f32 %v53, %v54
  %161 = vmax.xlane.f32.xlu0 %v160
  %v162 = vpop.xlane.xlu0 %161
  %v163 = vmax.f32 %v55, %v56
  %164 = vmax.xlane.f32.xlu0 %v163
  %v165 = vpop.xlane.xlu0 %164
  %v166 = vmax.f32 %v57, %v58
  %167 = vmax.xlane.f32.xlu0 %v166
  %v168 = vpop.xlane.xlu0 %167
  %v169 = vmax.f32 %v59, %v60
  %170 = vmax.xlane.f32.xlu0 %v169
  %v171 = vpop.xlane.xlu0 %170
  %v172 = vmax.f32 %v61, %v62
  %173 = vmax.xlane.f32.xlu0 %v172
  %v174 = vpop.xlane.xlu0 %173
  %v175 = vmul.f32 %v14, %v111
  %v176 = vmul.f32 %v15, %v112
  %v177 = vmul.f32 %v16, %v113
  %v178 = vmul.f32 %v17, %v114
  %v179 = vmul.f32 %v18, %v115
  %v180 = vmul.f32 %v19, %v116
  %v181 = vmul.f32 %v20, %v117
  %v182 = vmul.f32 %v21, %v118
  %v183 = vmul.f32 %v22, %v119
  %v184 = vmul.f32 %v23, %v120
  %v185 = vmul.f32 %v24, %v121
  %v186 = vmul.f32 %v25, %v122
  %v187 = vmul.f32 %v26, %v123
  %v188 = vmul.f32 %v27, %v124
  %v189 = vmul.f32 %v28, %v125
  %v190 = vmul.f32 %v29, %v126
  %vm191 = vcmask 64512
  %v192 = vsel %vm191, %v175, 0.0
  %v193 = vsel %vm191, %v176, 0.0
  %v194 = vadd.f32 %v192, %v193
  %v195 = vsel %vm191, %v177, 0.0
  %v196 = vadd.f32 %v194, %v195
  %v197 = vsel %vm191, %v178, 0.0
  %v198 = vadd.f32 %v196, %v197
  %v199 = vsel %vm191, %v179, 0.0
  %v200 = vadd.f32 %v198, %v199
  %v201 = vsel %vm191, %v180, 0.0
  %v202 = vadd.f32 %v200, %v201
  %v203 = vsel %vm191, %v181, 0.0
  %v204 = vadd.f32 %v202, %v203
  %v205 = vsel %vm191, %v182, 0.0
  %v206 = vadd.f32 %v204, %v205
  %v207 = vsel %vm191, %v183, 0.0
  %v208 = vadd.f32 %v206, %v207
  %v209 = vsel %vm191, %v184, 0.0
  %v210 = vadd.f32 %v208, %v209
  %v211 = vsel %vm191, %v185, 0.0
  %v212 = vadd.f32 %v210, %v211
  %v213 = vsel %vm191, %v186, 0.0
  %v214 = vadd.f32 %v212, %v213
  %v215 = vsel %vm191, %v187, 0.0
  %v216 = vadd.f32 %v214, %v215
  %v217 = vsel %vm191, %v188, 0.0
  %v218 = vadd.f32 %v216, %v217
  %v219 = vsel %vm191, %v189, 0.0
  %v220 = vadd.f32 %v218, %v219
  %v221 = vsel %vm191, %v190, 0.0
  %v222 = vadd.f32 %v220, %v221
  %v223 = vrot.slane %v222, 4
  %v224 = vadd.f32 %v222, %v223
  %v225 = vrot.slane %v224, 2
  %v226 = vadd.f32 %v224, %v225
  %v227 = vrot.slane %v226, 1
  %v228 = vadd.f32 %v226, %v227
  %v229 = vadd.f32 %v228, %v30
  %v230 = vmul.f32 %v14, %v129
  %v231 = vmul.f32 %v15, %v132
  %v232 = vmul.f32 %v16, %v135
  %v233 = vmul.f32 %v17, %v138
  %v234 = vmul.f32 %v18, %v141
  %v235 = vmul.f32 %v19, %v144
  %v236 = vmul.f32 %v20, %v147
  %v237 = vmul.f32 %v21, %v150
  %v238 = vmul.f32 %v22, %v153
  %v239 = vmul.f32 %v23, %v156
  %v240 = vmul.f32 %v24, %v159
  %v241 = vmul.f32 %v25, %v162
  %v242 = vmul.f32 %v26, %v165
  %v243 = vmul.f32 %v27, %v168
  %v244 = vmul.f32 %v28, %v171
  %v245 = vmul.f32 %v29, %v174
  %v246 = vsel %vm191, %v230, 0.0
  %v247 = vsel %vm191, %v231, 0.0
  %v248 = vadd.f32 %v246, %v247
  %v249 = vsel %vm191, %v232, 0.0
  %v250 = vadd.f32 %v248, %v249
  %v251 = vsel %vm191, %v233, 0.0
  %v252 = vadd.f32 %v250, %v251
  %v253 = vsel %vm191, %v234, 0.0
  %v254 = vadd.f32 %v252, %v253
  %v255 = vsel %vm191, %v235, 0.0
  %v256 = vadd.f32 %v254, %v255
  %v257 = vsel %vm191, %v236, 0.0
  %v258 = vadd.f32 %v256, %v257
  %v259 = vsel %vm191, %v237, 0.0
  %v260 = vadd.f32 %v258, %v259
  %v261 = vsel %vm191, %v238, 0.0
  %v262 = vadd.f32 %v260, %v261
  %v263 = vsel %vm191, %v239, 0.0
  %v264 = vadd.f32 %v262, %v263
  %v265 = vsel %vm191, %v240, 0.0
  %v266 = vadd.f32 %v264, %v265
  %v267 = vsel %vm191, %v241, 0.0
  %v268 = vadd.f32 %v266, %v267
  %v269 = vsel %vm191, %v242, 0.0
  %v270 = vadd.f32 %v268, %v269
  %v271 = vsel %vm191, %v243, 0.0
  %v272 = vadd.f32 %v270, %v271
  %v273 = vsel %vm191, %v244, 0.0
  %v274 = vadd.f32 %v272, %v273
  %v275 = vsel %vm191, %v245, 0.0
  %v276 = vadd.f32 %v274, %v275
  %v277 = vrot.slane %v276, 4
  %v278 = vadd.f32 %v276, %v277
  %v279 = vrot.slane %v278, 2
  %v280 = vadd.f32 %v278, %v279
  %v281 = vrot.slane %v280, 1
  %v282 = vadd.f32 %v280, %v281
  %v283 = vadd.f32 %v282, %v30
  %v284 = vmax.f32 %v229, 0.0
  %v285 = vmax.f32 %v283, 0.0
  %v286 = vadd.f32 %v284, %v285
  %v287 = vlaneseq
  %v288 = vshrl.u32 %v287, 7
  %v289 = vsub.s32 0, %v288
  %v290 = vrot.slane %v286, %v289
  %292 = vrot.lane.b32.xlu0 %v290, 8
  %v293 = vpop.permute.xlu0 %292
  %v295 = vmul.f32 %v14, %v293
  %v296 = vmul.f32 %v15, %v293
  %v297 = vmul.f32 %v16, %v293
  %v298 = vmul.f32 %v17, %v293
  %v299 = vmul.f32 %v18, %v293
  %v300 = vmul.f32 %v19, %v293
  %v301 = vmul.f32 %v20, %v293
  %v302 = vmul.f32 %v21, %v293
  %v303 = vmul.f32 %v22, %v293
  %v304 = vmul.f32 %v23, %v293
  %v305 = vmul.f32 %v24, %v293
  %v306 = vmul.f32 %v25, %v293
  %v307 = vmul.f32 %v26, %v293
  %v308 = vmul.f32 %v27, %v293
  %v309 = vmul.f32 %v28, %v293
  %v310 = vmul.f32 %v29, %v293
  %327 = vrot.lane.b32.xlu0 %v295, 120
  %v328 = vpop.permute.xlu0 %327
  %329 = vrot.lane.b32.xlu0 %v296, 120
  %v330 = vpop.permute.xlu0 %329
  %331 = vrot.lane.b32.xlu0 %v297, 120
  %v332 = vpop.permute.xlu0 %331
  %333 = vrot.lane.b32.xlu0 %v298, 120
  %v334 = vpop.permute.xlu0 %333
  %335 = vrot.lane.b32.xlu0 %v299, 120
  %v336 = vpop.permute.xlu0 %335
  %337 = vrot.lane.b32.xlu0 %v300, 120
  %v338 = vpop.permute.xlu0 %337
  %339 = vrot.lane.b32.xlu0 %v301, 120
  %v340 = vpop.permute.xlu0 %339
  %341 = vrot.lane.b32.xlu0 %v302, 120
  %v342 = vpop.permute.xlu0 %341
  %343 = vrot.lane.b32.xlu0 %v303, 120
  %v344 = vpop.permute.xlu0 %343
  %345 = vrot.lane.b32.xlu0 %v304, 120
  %v346 = vpop.permute.xlu0 %345
  %347 = vrot.lane.b32.xlu0 %v305, 120
  %v348 = vpop.permute.xlu0 %347
  %349 = vrot.lane.b32.xlu0 %v306, 120
  %v350 = vpop.permute.xlu0 %349
  %351 = vrot.lane.b32.xlu0 %v307, 120
  %v352 = vpop.permute.xlu0 %351
  %353 = vrot.lane.b32.xlu0 %v308, 120
  %v354 = vpop.permute.xlu0 %353
  %355 = vrot.lane.b32.xlu0 %v309, 120
  %v356 = vpop.permute.xlu0 %355
  %357 = vrot.lane.b32.xlu0 %v310, 120
  %v358 = vpop.permute.xlu0 %357
  %v375 = vsel %vm191, %v328, 0.0
  %376 = vadd.xlane.f32.xlu0 %v375
  %v377 = vpop.xlane.xlu0 %376
  %v378 = vsel %vm191, %v330, 0.0
  %379 = vadd.xlane.f32.xlu0 %v378
  %v380 = vpop.xlane.xlu0 %379
  %v381 = vsel %vm191, %v332, 0.0
  %382 = vadd.xlane.f32.xlu0 %v381
  %v383 = vpop.xlane.xlu0 %382
  %v384 = vsel %vm191, %v334, 0.0
  %385 = vadd.xlane.f32.xlu0 %v384
  %v386 = vpop.xlane.xlu0 %385
  %v387 = vsel %vm191, %v336, 0.0
  %388 = vadd.xlane.f32.xlu0 %v387
  %v389 = vpop.xlane.xlu0 %388
  %v390 = vsel %vm191, %v338, 0.0
  %391 = vadd.xlane.f32.xlu0 %v390
  %v392 = vpop.xlane.xlu0 %391
  %v393 = vsel %vm191, %v340, 0.0
  %394 = vadd.xlane.f32.xlu0 %v393
  %v395 = vpop.xlane.xlu0 %394
  %v396 = vsel %vm191, %v342, 0.0
  %397 = vadd.xlane.f32.xlu0 %v396
  %v398 = vpop.xlane.xlu0 %397
  %v399 = vsel %vm191, %v344, 0.0
  %400 = vadd.xlane.f32.xlu0 %v399
  %v401 = vpop.xlane.xlu0 %400
  %v402 = vsel %vm191, %v346, 0.0
  %403 = vadd.xlane.f32.xlu0 %v402
  %v404 = vpop.xlane.xlu0 %403
  %v405 = vsel %vm191, %v348, 0.0
  %406 = vadd.xlane.f32.xlu0 %v405
  %v407 = vpop.xlane.xlu0 %406
  %v408 = vsel %vm191, %v350, 0.0
  %409 = vadd.xlane.f32.xlu0 %v408
  %v410 = vpop.xlane.xlu0 %409
  %v411 = vsel %vm191, %v352, 0.0
  %412 = vadd.xlane.f32.xlu0 %v411
  %v413 = vpop.xlane.xlu0 %412
  %v414 = vsel %vm191, %v354, 0.0
  %415 = vadd.xlane.f32.xlu0 %v414
  %v416 = vpop.xlane.xlu0 %415
  %v417 = vsel %vm191, %v356, 0.0
  %418 = vadd.xlane.f32.xlu0 %v417
  %v419 = vpop.xlane.xlu0 %418
  %v420 = vsel %vm191, %v358, 0.0
  %421 = vadd.xlane.f32.xlu0 %v420
  %v422 = vpop.xlane.xlu0 %421
  %v423 = vadd.f32 %v377, %v14
  %v424 = vadd.f32 %v380, %v15
  %v425 = vadd.f32 %v383, %v16
  %v426 = vadd.f32 %v386, %v17
  %v427 = vadd.f32 %v389, %v18
  %v428 = vadd.f32 %v392, %v19
  %v429 = vadd.f32 %v395, %v20
  %v430 = vadd.f32 %v398, %v21
  %v431 = vadd.f32 %v401, %v22
  %v432 = vadd.f32 %v404, %v23
  %v433 = vadd.f32 %v407, %v24
  %v434 = vadd.f32 %v410, %v25
  %v435 = vadd.f32 %v413, %v26
  %v436 = vadd.f32 %v416, %v27
  %v437 = vadd.f32 %v419, %v28
  %v438 = vadd.f32 %v422, %v29
  %v439 = vsub.f32 0.0, %v423
  %v440 = vsub.f32 0.0, %v424
  %v441 = vsub.f32 0.0, %v425
  %v442 = vsub.f32 0.0, %v426
  %v443 = vsub.f32 0.0, %v427
  %v444 = vsub.f32 0.0, %v428
  %v445 = vsub.f32 0.0, %v429
  %v446 = vsub.f32 0.0, %v430
  %v447 = vsub.f32 0.0, %v431
  %v448 = vsub.f32 0.0, %v432
  %v449 = vsub.f32 0.0, %v433
  %v450 = vsub.f32 0.0, %v434
  %v451 = vsub.f32 0.0, %v435
  %v452 = vsub.f32 0.0, %v436
  %v453 = vsub.f32 0.0, %v437
  %v454 = vsub.f32 0.0, %v438
  %v455 = vmul.f32 %v439, 1.442695
  %v456 = vpow.pop %v455
  %v457 = vmul.f32 %v440, 1.442695
  %v458 = vpow.pop %v457
  %v459 = vmul.f32 %v441, 1.442695
  %v460 = vpow.pop %v459
  %v461 = vmul.f32 %v442, 1.442695
  %v462 = vpow.pop %v461
  %v463 = vmul.f32 %v443, 1.442695
  %v464 = vpow.pop %v463
  %v465 = vmul.f32 %v444, 1.442695
  %v466 = vpow.pop %v465
  %v467 = vmul.f32 %v445, 1.442695
  %v468 = vpow.pop %v467
  %v469 = vmul.f32 %v446, 1.442695
  %v470 = vpow.pop %v469
  %v471 = vmul.f32 %v447, 1.442695
  %v472 = vpow.pop %v471
  %v473 = vmul.f32 %v448, 1.442695
  %v474 = vpow.pop %v473
  %v475 = vmul.f32 %v449, 1.442695
  %v476 = vpow.pop %v475
  %v477 = vmul.f32 %v450, 1.442695
  %v478 = vpow.pop %v477
  %v479 = vmul.f32 %v451, 1.442695
  %v480 = vpow.pop %v479
  %v481 = vmul.f32 %v452, 1.442695
  %v482 = vpow.pop %v481
  %v483 = vmul.f32 %v453, 1.442695
  %v484 = vpow.pop %v483
  %v485 = vmul.f32 %v454, 1.442695
  %v486 = vpow.pop %v485
  %v487 = vadd.f32 %v456, 1.0
  %v488 = vadd.f32 %v458, 1.0
  %v489 = vadd.f32 %v460, 1.0
  %v490 = vadd.f32 %v462, 1.0
  %v491 = vadd.f32 %v464, 1.0
  %v492 = vadd.f32 %v466, 1.0
  %v493 = vadd.f32 %v468, 1.0
  %v494 = vadd.f32 %v470, 1.0
  %v495 = vadd.f32 %v472, 1.0
  %v496 = vadd.f32 %v474, 1.0
  %v497 = vadd.f32 %v476, 1.0
  %v498 = vadd.f32 %v478, 1.0
  %v499 = vadd.f32 %v480, 1.0
  %v500 = vadd.f32 %v482, 1.0
  %v501 = vadd.f32 %v484, 1.0
  %v502 = vadd.f32 %v486, 1.0
  %v503 = vrcp.pop %v487
  %v504 = vrcp.pop %v488
  %v505 = vrcp.pop %v489
  %v506 = vrcp.pop %v490
  %v507 = vrcp.pop %v491
  %v508 = vrcp.pop %v492
  %v509 = vrcp.pop %v493
  %v510 = vrcp.pop %v494
  %v511 = vrcp.pop %v495
  %v512 = vrcp.pop %v496
  %v513 = vrcp.pop %v497
  %v514 = vrcp.pop %v498
  %v515 = vrcp.pop %v499
  %v516 = vrcp.pop %v500
  %v517 = vrcp.pop %v501
  %v518 = vrcp.pop %v502
  %520 = vset.pattern.permute.xlu0 16
  %521 = vperm.xlu0 %520, %v503
  %v522 = vpop.permute.xlu0 %521
  %525 = vset.pattern.permute.xlu0 16
  %526 = vperm.xlu0 %525, %v504
  %v527 = vpop.permute.xlu0 %526
  %530 = vset.pattern.permute.xlu0 16
  %531 = vperm.xlu0 %530, %v505
  %v532 = vpop.permute.xlu0 %531
  %535 = vset.pattern.permute.xlu0 16
  %536 = vperm.xlu0 %535, %v506
  %v537 = vpop.permute.xlu0 %536
  %540 = vset.pattern.permute.xlu0 16
  %541 = vperm.xlu0 %540, %v507
  %v542 = vpop.permute.xlu0 %541
  %545 = vset.pattern.permute.xlu0 16
  %546 = vperm.xlu0 %545, %v508
  %v547 = vpop.permute.xlu0 %546
  %550 = vset.pattern.permute.xlu0 16
  %551 = vperm.xlu0 %550, %v509
  %v552 = vpop.permute.xlu0 %551
  %555 = vset.pattern.permute.xlu0 16
  %556 = vperm.xlu0 %555, %v510
  %v557 = vpop.permute.xlu0 %556
  %560 = vset.pattern.permute.xlu0 16
  %561 = vperm.xlu0 %560, %v511
  %v562 = vpop.permute.xlu0 %561
  %565 = vset.pattern.permute.xlu0 16
  %566 = vperm.xlu0 %565, %v512
  %v567 = vpop.permute.xlu0 %566
  %570 = vset.pattern.permute.xlu0 16
  %571 = vperm.xlu0 %570, %v513
  %v572 = vpop.permute.xlu0 %571
  %575 = vset.pattern.permute.xlu0 16
  %576 = vperm.xlu0 %575, %v514
  %v577 = vpop.permute.xlu0 %576
  %580 = vset.pattern.permute.xlu0 16
  %581 = vperm.xlu0 %580, %v515
  %v582 = vpop.permute.xlu0 %581
  %585 = vset.pattern.permute.xlu0 16
  %586 = vperm.xlu0 %585, %v516
  %v587 = vpop.permute.xlu0 %586
  %590 = vset.pattern.permute.xlu0 16
  %591 = vperm.xlu0 %590, %v517
  %v592 = vpop.permute.xlu0 %591
  %595 = vset.pattern.permute.xlu0 16
  %596 = vperm.xlu0 %595, %v518
  %v597 = vpop.permute.xlu0 %596
  %v599 = vmul.f32 %v31, %v522
  %v600 = vmul.f32 %v32, %v522
  %v601 = vmul.f32 %v33, %v527
  %v602 = vmul.f32 %v34, %v527
  %v603 = vmul.f32 %v35, %v532
  %v604 = vmul.f32 %v36, %v532
  %v605 = vmul.f32 %v37, %v537
  %v606 = vmul.f32 %v38, %v537
  %v607 = vmul.f32 %v39, %v542
  %v608 = vmul.f32 %v40, %v542
  %v609 = vmul.f32 %v41, %v547
  %v610 = vmul.f32 %v42, %v547
  %v611 = vmul.f32 %v43, %v552
  %v612 = vmul.f32 %v44, %v552
  %v613 = vmul.f32 %v45, %v557
  %v614 = vmul.f32 %v46, %v557
  %v615 = vmul.f32 %v47, %v562
  %v616 = vmul.f32 %v48, %v562
  %v617 = vmul.f32 %v49, %v567
  %v618 = vmul.f32 %v50, %v567
  %v619 = vmul.f32 %v51, %v572
  %v620 = vmul.f32 %v52, %v572
  %v621 = vmul.f32 %v53, %v577
  %v622 = vmul.f32 %v54, %v577
  %v623 = vmul.f32 %v55, %v582
  %v624 = vmul.f32 %v56, %v582
  %v625 = vmul.f32 %v57, %v587
  %v626 = vmul.f32 %v58, %v587
  %v627 = vmul.f32 %v59, %v592
  %v628 = vmul.f32 %v60, %v592
  %v629 = vmul.f32 %v61, %v597
  %v630 = vmul.f32 %v62, %v597
  %631 = vst [vmem:[%s3] sm:$0xff] %v599
  %632 = vst [vmem:[%s3 + $0x8] sm:$0xff] %v600
  %633 = vst [vmem:[%s3 + $0x10] sm:$0xff] %v601
  %634 = vst [vmem:[%s3 + $0x18] sm:$0xff] %v602
  %635 = vst [vmem:[%s3 + $0x20] sm:$0xff] %v603
  %636 = vst [vmem:[%s3 + $0x28] sm:$0xff] %v604
  %637 = vst [vmem:[%s3 + $0x30] sm:$0xff] %v605
  %638 = vst [vmem:[%s3 + $0x38] sm:$0xff] %v606
  %639 = vst [vmem:[%s3 + $0x40] sm:$0xff] %v607
  %640 = vst [vmem:[%s3 + $0x48] sm:$0xff] %v608
  %641 = vst [vmem:[%s3 + $0x50] sm:$0xff] %v609
  %642 = vst [vmem:[%s3 + $0x58] sm:$0xff] %v610
  %643 = vst [vmem:[%s3 + $0x60] sm:$0xff] %v611
  %644 = vst [vmem:[%s3 + $0x68] sm:$0xff] %v612
  %645 = vst [vmem:[%s3 + $0x70] sm:$0xff] %v613
  %646 = vst [vmem:[%s3 + $0x78] sm:$0xff] %v614
  %647 = vst [vmem:[%s3 + $0x80] sm:$0xff] %v615
  %648 = vst [vmem:[%s3 + $0x88] sm:$0xff] %v616
  %649 = vst [vmem:[%s3 + $0x90] sm:$0xff] %v617
  %650 = vst [vmem:[%s3 + $0x98] sm:$0xff] %v618
  %651 = vst [vmem:[%s3 + $0xa0] sm:$0xff] %v619
  %652 = vst [vmem:[%s3 + $0xa8] sm:$0xff] %v620
  %653 = vst [vmem:[%s3 + $0xb0] sm:$0xff] %v621
  %654 = vst [vmem:[%s3 + $0xb8] sm:$0xff] %v622
  %655 = vst [vmem:[%s3 + $0xc0] sm:$0xff] %v623
  %656 = vst [vmem:[%s3 + $0xc8] sm:$0xff] %v624
  %657 = vst [vmem:[%s3 + $0xd0] sm:$0xff] %v625
  %658 = vst [vmem:[%s3 + $0xd8] sm:$0xff] %v626
  %659 = vst [vmem:[%s3 + $0xe0] sm:$0xff] %v627
  %660 = vst [vmem:[%s3 + $0xe8] sm:$0xff] %v628
  %661 = vst [vmem:[%s3 + $0xf0] sm:$0xff] %v629
  %662 = vst [vmem:[%s3 + $0xf8] sm:$0xff] %v630
  %s663 = scalar_lea.vmem %s0, 256
  %v664 = vld [vmem:[%s663] sm:$0xff]
  %v665 = vld [vmem:[%s663 + $0x8] sm:$0xff]
  %v666 = vld [vmem:[%s663 + $0x10] sm:$0xff]
  %v667 = vld [vmem:[%s663 + $0x18] sm:$0xff]
  %v668 = vld [vmem:[%s663 + $0x20] sm:$0xff]
  %v669 = vld [vmem:[%s663 + $0x28] sm:$0xff]
  %v670 = vld [vmem:[%s663 + $0x30] sm:$0xff]
  %v671 = vld [vmem:[%s663 + $0x38] sm:$0xff]
  %v672 = vld [vmem:[%s663 + $0x40] sm:$0xff]
  %v673 = vld [vmem:[%s663 + $0x48] sm:$0xff]
  %v674 = vld [vmem:[%s663 + $0x50] sm:$0xff]
  %v675 = vld [vmem:[%s663 + $0x58] sm:$0xff]
  %v676 = vld [vmem:[%s663 + $0x60] sm:$0xff]
  %v677 = vld [vmem:[%s663 + $0x68] sm:$0xff]
  %v678 = vld [vmem:[%s663 + $0x70] sm:$0xff]
  %v679 = vld [vmem:[%s663 + $0x78] sm:$0xff]
  %v680 = vld [vmem:[%s663 + $0x80] sm:$0xff]
  %v681 = vld [vmem:[%s663 + $0x88] sm:$0xff]
  %v682 = vld [vmem:[%s663 + $0x90] sm:$0xff]
  %v683 = vld [vmem:[%s663 + $0x98] sm:$0xff]
  %v684 = vld [vmem:[%s663 + $0xa0] sm:$0xff]
  %v685 = vld [vmem:[%s663 + $0xa8] sm:$0xff]
  %v686 = vld [vmem:[%s663 + $0xb0] sm:$0xff]
  %v687 = vld [vmem:[%s663 + $0xb8] sm:$0xff]
  %v688 = vld [vmem:[%s663 + $0xc0] sm:$0xff]
  %v689 = vld [vmem:[%s663 + $0xc8] sm:$0xff]
  %v690 = vld [vmem:[%s663 + $0xd0] sm:$0xff]
  %v691 = vld [vmem:[%s663 + $0xd8] sm:$0xff]
  %v692 = vld [vmem:[%s663 + $0xe0] sm:$0xff]
  %v693 = vld [vmem:[%s663 + $0xe8] sm:$0xff]
  %v694 = vld [vmem:[%s663 + $0xf0] sm:$0xff]
  %v695 = vld [vmem:[%s663 + $0xf8] sm:$0xff]
  %v696 = vadd.f32 %v664, %v665
  %697 = vadd.xlane.f32.xlu0 %v696
  %v698 = vpop.xlane.xlu0 %697
  %v699 = vadd.f32 %v666, %v667
  %700 = vadd.xlane.f32.xlu0 %v699
  %v701 = vpop.xlane.xlu0 %700
  %v702 = vadd.f32 %v668, %v669
  %703 = vadd.xlane.f32.xlu0 %v702
  %v704 = vpop.xlane.xlu0 %703
  %v705 = vadd.f32 %v670, %v671
  %706 = vadd.xlane.f32.xlu0 %v705
  %v707 = vpop.xlane.xlu0 %706
  %v708 = vadd.f32 %v672, %v673
  %709 = vadd.xlane.f32.xlu0 %v708
  %v710 = vpop.xlane.xlu0 %709
  %v711 = vadd.f32 %v674, %v675
  %712 = vadd.xlane.f32.xlu0 %v711
  %v713 = vpop.xlane.xlu0 %712
  %v714 = vadd.f32 %v676, %v677
  %715 = vadd.xlane.f32.xlu0 %v714
  %v716 = vpop.xlane.xlu0 %715
  %v717 = vadd.f32 %v678, %v679
  %718 = vadd.xlane.f32.xlu0 %v717
  %v719 = vpop.xlane.xlu0 %718
  %v720 = vadd.f32 %v680, %v681
  %721 = vadd.xlane.f32.xlu0 %v720
  %v722 = vpop.xlane.xlu0 %721
  %v723 = vadd.f32 %v682, %v683
  %724 = vadd.xlane.f32.xlu0 %v723
  %v725 = vpop.xlane.xlu0 %724
  %v726 = vadd.f32 %v684, %v685
  %727 = vadd.xlane.f32.xlu0 %v726
  %v728 = vpop.xlane.xlu0 %727
  %v729 = vadd.f32 %v686, %v687
  %730 = vadd.xlane.f32.xlu0 %v729
  %v731 = vpop.xlane.xlu0 %730
  %v732 = vadd.f32 %v688, %v689
  %733 = vadd.xlane.f32.xlu0 %v732
  %v734 = vpop.xlane.xlu0 %733
  %v735 = vadd.f32 %v690, %v691
  %736 = vadd.xlane.f32.xlu0 %v735
  %v737 = vpop.xlane.xlu0 %736
  %v738 = vadd.f32 %v692, %v693
  %739 = vadd.xlane.f32.xlu0 %v738
  %v740 = vpop.xlane.xlu0 %739
  %v741 = vadd.f32 %v694, %v695
  %742 = vadd.xlane.f32.xlu0 %v741
  %v743 = vpop.xlane.xlu0 %742
  %v744 = vmul.f32 %v698, 0.00390625
  %v745 = vmul.f32 %v701, 0.00390625
  %v746 = vmul.f32 %v704, 0.00390625
  %v747 = vmul.f32 %v707, 0.00390625
  %v748 = vmul.f32 %v710, 0.00390625
  %v749 = vmul.f32 %v713, 0.00390625
  %v750 = vmul.f32 %v716, 0.00390625
  %v751 = vmul.f32 %v719, 0.00390625
  %v752 = vmul.f32 %v722, 0.00390625
  %v753 = vmul.f32 %v725, 0.00390625
  %v754 = vmul.f32 %v728, 0.00390625
  %v755 = vmul.f32 %v731, 0.00390625
  %v756 = vmul.f32 %v734, 0.00390625
  %v757 = vmul.f32 %v737, 0.00390625
  %v758 = vmul.f32 %v740, 0.00390625
  %v759 = vmul.f32 %v743, 0.00390625
  %v760 = vmax.f32 %v664, %v665
  %761 = vmax.xlane.f32.xlu0 %v760
  %v762 = vpop.xlane.xlu0 %761
  %v763 = vmax.f32 %v666, %v667
  %764 = vmax.xlane.f32.xlu0 %v763
  %v765 = vpop.xlane.xlu0 %764
  %v766 = vmax.f32 %v668, %v669
  %767 = vmax.xlane.f32.xlu0 %v766
  %v768 = vpop.xlane.xlu0 %767
  %v769 = vmax.f32 %v670, %v671
  %770 = vmax.xlane.f32.xlu0 %v769
  %v771 = vpop.xlane.xlu0 %770
  %v772 = vmax.f32 %v672, %v673
  %773 = vmax.xlane.f32.xlu0 %v772
  %v774 = vpop.xlane.xlu0 %773
  %v775 = vmax.f32 %v674, %v675
  %776 = vmax.xlane.f32.xlu0 %v775
  %v777 = vpop.xlane.xlu0 %776
  %v778 = vmax.f32 %v676, %v677
  %779 = vmax.xlane.f32.xlu0 %v778
  %v780 = vpop.xlane.xlu0 %779
  %v781 = vmax.f32 %v678, %v679
  %782 = vmax.xlane.f32.xlu0 %v781
  %v783 = vpop.xlane.xlu0 %782
  %v784 = vmax.f32 %v680, %v681
  %785 = vmax.xlane.f32.xlu0 %v784
  %v786 = vpop.xlane.xlu0 %785
  %v787 = vmax.f32 %v682, %v683
  %788 = vmax.xlane.f32.xlu0 %v787
  %v789 = vpop.xlane.xlu0 %788
  %v790 = vmax.f32 %v684, %v685
  %791 = vmax.xlane.f32.xlu0 %v790
  %v792 = vpop.xlane.xlu0 %791
  %v793 = vmax.f32 %v686, %v687
  %794 = vmax.xlane.f32.xlu0 %v793
  %v795 = vpop.xlane.xlu0 %794
  %v796 = vmax.f32 %v688, %v689
  %797 = vmax.xlane.f32.xlu0 %v796
  %v798 = vpop.xlane.xlu0 %797
  %v799 = vmax.f32 %v690, %v691
  %800 = vmax.xlane.f32.xlu0 %v799
  %v801 = vpop.xlane.xlu0 %800
  %v802 = vmax.f32 %v692, %v693
  %803 = vmax.xlane.f32.xlu0 %v802
  %v804 = vpop.xlane.xlu0 %803
  %v805 = vmax.f32 %v694, %v695
  %806 = vmax.xlane.f32.xlu0 %v805
  %v807 = vpop.xlane.xlu0 %806
  %v808 = vmul.f32 %v14, %v744
  %v809 = vmul.f32 %v15, %v745
  %v810 = vmul.f32 %v16, %v746
  %v811 = vmul.f32 %v17, %v747
  %v812 = vmul.f32 %v18, %v748
  %v813 = vmul.f32 %v19, %v749
  %v814 = vmul.f32 %v20, %v750
  %v815 = vmul.f32 %v21, %v751
  %v816 = vmul.f32 %v22, %v752
  %v817 = vmul.f32 %v23, %v753
  %v818 = vmul.f32 %v24, %v754
  %v819 = vmul.f32 %v25, %v755
  %v820 = vmul.f32 %v26, %v756
  %v821 = vmul.f32 %v27, %v757
  %v822 = vmul.f32 %v28, %v758
  %v823 = vmul.f32 %v29, %v759
  %v824 = vsel %vm191, %v808, 0.0
  %v825 = vsel %vm191, %v809, 0.0
  %v826 = vadd.f32 %v824, %v825
  %v827 = vsel %vm191, %v810, 0.0
  %v828 = vadd.f32 %v826, %v827
  %v829 = vsel %vm191, %v811, 0.0
  %v830 = vadd.f32 %v828, %v829
  %v831 = vsel %vm191, %v812, 0.0
  %v832 = vadd.f32 %v830, %v831
  %v833 = vsel %vm191, %v813, 0.0
  %v834 = vadd.f32 %v832, %v833
  %v835 = vsel %vm191, %v814, 0.0
  %v836 = vadd.f32 %v834, %v835
  %v837 = vsel %vm191, %v815, 0.0
  %v838 = vadd.f32 %v836, %v837
  %v839 = vsel %vm191, %v816, 0.0
  %v840 = vadd.f32 %v838, %v839
  %v841 = vsel %vm191, %v817, 0.0
  %v842 = vadd.f32 %v840, %v841
  %v843 = vsel %vm191, %v818, 0.0
  %v844 = vadd.f32 %v842, %v843
  %v845 = vsel %vm191, %v819, 0.0
  %v846 = vadd.f32 %v844, %v845
  %v847 = vsel %vm191, %v820, 0.0
  %v848 = vadd.f32 %v846, %v847
  %v849 = vsel %vm191, %v821, 0.0
  %v850 = vadd.f32 %v848, %v849
  %v851 = vsel %vm191, %v822, 0.0
  %v852 = vadd.f32 %v850, %v851
  %v853 = vsel %vm191, %v823, 0.0
  %v854 = vadd.f32 %v852, %v853
  %v855 = vrot.slane %v854, 4
  %v856 = vadd.f32 %v854, %v855
  %v857 = vrot.slane %v856, 2
  %v858 = vadd.f32 %v856, %v857
  %v859 = vrot.slane %v858, 1
  %v860 = vadd.f32 %v858, %v859
  %v861 = vadd.f32 %v860, %v30
  %v862 = vmul.f32 %v14, %v762
  %v863 = vmul.f32 %v15, %v765
  %v864 = vmul.f32 %v16, %v768
  %v865 = vmul.f32 %v17, %v771
  %v866 = vmul.f32 %v18, %v774
  %v867 = vmul.f32 %v19, %v777
  %v868 = vmul.f32 %v20, %v780
  %v869 = vmul.f32 %v21, %v783
  %v870 = vmul.f32 %v22, %v786
  %v871 = vmul.f32 %v23, %v789
  %v872 = vmul.f32 %v24, %v792
  %v873 = vmul.f32 %v25, %v795
  %v874 = vmul.f32 %v26, %v798
  %v875 = vmul.f32 %v27, %v801
  %v876 = vmul.f32 %v28, %v804
  %v877 = vmul.f32 %v29, %v807
  %v878 = vsel %vm191, %v862, 0.0
  %v879 = vsel %vm191, %v863, 0.0
  %v880 = vadd.f32 %v878, %v879
  %v881 = vsel %vm191, %v864, 0.0
  %v882 = vadd.f32 %v880, %v881
  %v883 = vsel %vm191, %v865, 0.0
  %v884 = vadd.f32 %v882, %v883
  %v885 = vsel %vm191, %v866, 0.0
  %v886 = vadd.f32 %v884, %v885
  %v887 = vsel %vm191, %v867, 0.0
  %v888 = vadd.f32 %v886, %v887
  %v889 = vsel %vm191, %v868, 0.0
  %v890 = vadd.f32 %v888, %v889
  %v891 = vsel %vm191, %v869, 0.0
  %v892 = vadd.f32 %v890, %v891
  %v893 = vsel %vm191, %v870, 0.0
  %v894 = vadd.f32 %v892, %v893
  %v895 = vsel %vm191, %v871, 0.0
  %v896 = vadd.f32 %v894, %v895
  %v897 = vsel %vm191, %v872, 0.0
  %v898 = vadd.f32 %v896, %v897
  %v899 = vsel %vm191, %v873, 0.0
  %v900 = vadd.f32 %v898, %v899
  %v901 = vsel %vm191, %v874, 0.0
  %v902 = vadd.f32 %v900, %v901
  %v903 = vsel %vm191, %v875, 0.0
  %v904 = vadd.f32 %v902, %v903
  %v905 = vsel %vm191, %v876, 0.0
  %v906 = vadd.f32 %v904, %v905
  %v907 = vsel %vm191, %v877, 0.0
  %v908 = vadd.f32 %v906, %v907
  %v909 = vrot.slane %v908, 4
  %v910 = vadd.f32 %v908, %v909
  %v911 = vrot.slane %v910, 2
  %v912 = vadd.f32 %v910, %v911
  %v913 = vrot.slane %v912, 1
  %v914 = vadd.f32 %v912, %v913
  %v915 = vadd.f32 %v914, %v30
  %v916 = vmax.f32 %v861, 0.0
  %v917 = vmax.f32 %v915, 0.0
  %v918 = vadd.f32 %v916, %v917
  %v919 = vlaneseq
  %v920 = vshrl.u32 %v919, 7
  %v921 = vsub.s32 0, %v920
  %v922 = vrot.slane %v918, %v921
  %924 = vrot.lane.b32.xlu0 %v922, 8
  %v925 = vpop.permute.xlu0 %924
  %v927 = vmul.f32 %v14, %v925
  %v928 = vmul.f32 %v15, %v925
  %v929 = vmul.f32 %v16, %v925
  %v930 = vmul.f32 %v17, %v925
  %v931 = vmul.f32 %v18, %v925
  %v932 = vmul.f32 %v19, %v925
  %v933 = vmul.f32 %v20, %v925
  %v934 = vmul.f32 %v21, %v925
  %v935 = vmul.f32 %v22, %v925
  %v936 = vmul.f32 %v23, %v925
  %v937 = vmul.f32 %v24, %v925
  %v938 = vmul.f32 %v25, %v925
  %v939 = vmul.f32 %v26, %v925
  %v940 = vmul.f32 %v27, %v925
  %v941 = vmul.f32 %v28, %v925
  %v942 = vmul.f32 %v29, %v925
  %959 = vrot.lane.b32.xlu0 %v927, 120
  %v960 = vpop.permute.xlu0 %959
  %961 = vrot.lane.b32.xlu0 %v928, 120
  %v962 = vpop.permute.xlu0 %961
  %963 = vrot.lane.b32.xlu0 %v929, 120
  %v964 = vpop.permute.xlu0 %963
  %965 = vrot.lane.b32.xlu0 %v930, 120
  %v966 = vpop.permute.xlu0 %965
  %967 = vrot.lane.b32.xlu0 %v931, 120
  %v968 = vpop.permute.xlu0 %967
  %969 = vrot.lane.b32.xlu0 %v932, 120
  %v970 = vpop.permute.xlu0 %969
  %971 = vrot.lane.b32.xlu0 %v933, 120
  %v972 = vpop.permute.xlu0 %971
  %973 = vrot.lane.b32.xlu0 %v934, 120
  %v974 = vpop.permute.xlu0 %973
  %975 = vrot.lane.b32.xlu0 %v935, 120
  %v976 = vpop.permute.xlu0 %975
  %977 = vrot.lane.b32.xlu0 %v936, 120
  %v978 = vpop.permute.xlu0 %977
  %979 = vrot.lane.b32.xlu0 %v937, 120
  %v980 = vpop.permute.xlu0 %979
  %981 = vrot.lane.b32.xlu0 %v938, 120
  %v982 = vpop.permute.xlu0 %981
  %983 = vrot.lane.b32.xlu0 %v939, 120
  %v984 = vpop.permute.xlu0 %983
  %985 = vrot.lane.b32.xlu0 %v940, 120
  %v986 = vpop.permute.xlu0 %985
  %987 = vrot.lane.b32.xlu0 %v941, 120
  %v988 = vpop.permute.xlu0 %987
  %989 = vrot.lane.b32.xlu0 %v942, 120
  %v990 = vpop.permute.xlu0 %989
  %v1007 = vsel %vm191, %v960, 0.0
  %1008 = vadd.xlane.f32.xlu0 %v1007
  %v1009 = vpop.xlane.xlu0 %1008
  %v1010 = vsel %vm191, %v962, 0.0
  %1011 = vadd.xlane.f32.xlu0 %v1010
  %v1012 = vpop.xlane.xlu0 %1011
  %v1013 = vsel %vm191, %v964, 0.0
  %1014 = vadd.xlane.f32.xlu0 %v1013
  %v1015 = vpop.xlane.xlu0 %1014
  %v1016 = vsel %vm191, %v966, 0.0
  %1017 = vadd.xlane.f32.xlu0 %v1016
  %v1018 = vpop.xlane.xlu0 %1017
  %v1019 = vsel %vm191, %v968, 0.0
  %1020 = vadd.xlane.f32.xlu0 %v1019
  %v1021 = vpop.xlane.xlu0 %1020
  %v1022 = vsel %vm191, %v970, 0.0
  %1023 = vadd.xlane.f32.xlu0 %v1022
  %v1024 = vpop.xlane.xlu0 %1023
  %v1025 = vsel %vm191, %v972, 0.0
  %1026 = vadd.xlane.f32.xlu0 %v1025
  %v1027 = vpop.xlane.xlu0 %1026
  %v1028 = vsel %vm191, %v974, 0.0
  %1029 = vadd.xlane.f32.xlu0 %v1028
  %v1030 = vpop.xlane.xlu0 %1029
  %v1031 = vsel %vm191, %v976, 0.0
  %1032 = vadd.xlane.f32.xlu0 %v1031
  %v1033 = vpop.xlane.xlu0 %1032
  %v1034 = vsel %vm191, %v978, 0.0
  %1035 = vadd.xlane.f32.xlu0 %v1034
  %v1036 = vpop.xlane.xlu0 %1035
  %v1037 = vsel %vm191, %v980, 0.0
  %1038 = vadd.xlane.f32.xlu0 %v1037
  %v1039 = vpop.xlane.xlu0 %1038
  %v1040 = vsel %vm191, %v982, 0.0
  %1041 = vadd.xlane.f32.xlu0 %v1040
  %v1042 = vpop.xlane.xlu0 %1041
  %v1043 = vsel %vm191, %v984, 0.0
  %1044 = vadd.xlane.f32.xlu0 %v1043
  %v1045 = vpop.xlane.xlu0 %1044
  %v1046 = vsel %vm191, %v986, 0.0
  %1047 = vadd.xlane.f32.xlu0 %v1046
  %v1048 = vpop.xlane.xlu0 %1047
  %v1049 = vsel %vm191, %v988, 0.0
  %1050 = vadd.xlane.f32.xlu0 %v1049
  %v1051 = vpop.xlane.xlu0 %1050
  %v1052 = vsel %vm191, %v990, 0.0
  %1053 = vadd.xlane.f32.xlu0 %v1052
  %v1054 = vpop.xlane.xlu0 %1053
  %v1055 = vadd.f32 %v1009, %v14
  %v1056 = vadd.f32 %v1012, %v15
  %v1057 = vadd.f32 %v1015, %v16
  %v1058 = vadd.f32 %v1018, %v17
  %v1059 = vadd.f32 %v1021, %v18
  %v1060 = vadd.f32 %v1024, %v19
  %v1061 = vadd.f32 %v1027, %v20
  %v1062 = vadd.f32 %v1030, %v21
  %v1063 = vadd.f32 %v1033, %v22
  %v1064 = vadd.f32 %v1036, %v23
  %v1065 = vadd.f32 %v1039, %v24
  %v1066 = vadd.f32 %v1042, %v25
  %v1067 = vadd.f32 %v1045, %v26
  %v1068 = vadd.f32 %v1048, %v27
  %v1069 = vadd.f32 %v1051, %v28
  %v1070 = vadd.f32 %v1054, %v29
  %v1071 = vsub.f32 0.0, %v1055
  %v1072 = vsub.f32 0.0, %v1056
  %v1073 = vsub.f32 0.0, %v1057
  %v1074 = vsub.f32 0.0, %v1058
  %v1075 = vsub.f32 0.0, %v1059
  %v1076 = vsub.f32 0.0, %v1060
  %v1077 = vsub.f32 0.0, %v1061
  %v1078 = vsub.f32 0.0, %v1062
  %v1079 = vsub.f32 0.0, %v1063
  %v1080 = vsub.f32 0.0, %v1064
  %v1081 = vsub.f32 0.0, %v1065
  %v1082 = vsub.f32 0.0, %v1066
  %v1083 = vsub.f32 0.0, %v1067
  %v1084 = vsub.f32 0.0, %v1068
  %v1085 = vsub.f32 0.0, %v1069
  %v1086 = vsub.f32 0.0, %v1070
  %v1087 = vmul.f32 %v1071, 1.442695
  %v1088 = vpow.pop %v1087
  %v1089 = vmul.f32 %v1072, 1.442695
  %v1090 = vpow.pop %v1089
  %v1091 = vmul.f32 %v1073, 1.442695
  %v1092 = vpow.pop %v1091
  %v1093 = vmul.f32 %v1074, 1.442695
  %v1094 = vpow.pop %v1093
  %v1095 = vmul.f32 %v1075, 1.442695
  %v1096 = vpow.pop %v1095
  %v1097 = vmul.f32 %v1076, 1.442695
  %v1098 = vpow.pop %v1097
  %v1099 = vmul.f32 %v1077, 1.442695
  %v1100 = vpow.pop %v1099
  %v1101 = vmul.f32 %v1078, 1.442695
  %v1102 = vpow.pop %v1101
  %v1103 = vmul.f32 %v1079, 1.442695
  %v1104 = vpow.pop %v1103
  %v1105 = vmul.f32 %v1080, 1.442695
  %v1106 = vpow.pop %v1105
  %v1107 = vmul.f32 %v1081, 1.442695
  %v1108 = vpow.pop %v1107
  %v1109 = vmul.f32 %v1082, 1.442695
  %v1110 = vpow.pop %v1109
  %v1111 = vmul.f32 %v1083, 1.442695
  %v1112 = vpow.pop %v1111
  %v1113 = vmul.f32 %v1084, 1.442695
  %v1114 = vpow.pop %v1113
  %v1115 = vmul.f32 %v1085, 1.442695
  %v1116 = vpow.pop %v1115
  %v1117 = vmul.f32 %v1086, 1.442695
  %v1118 = vpow.pop %v1117
  %v1119 = vadd.f32 %v1088, 1.0
  %v1120 = vadd.f32 %v1090, 1.0
  %v1121 = vadd.f32 %v1092, 1.0
  %v1122 = vadd.f32 %v1094, 1.0
  %v1123 = vadd.f32 %v1096, 1.0
  %v1124 = vadd.f32 %v1098, 1.0
  %v1125 = vadd.f32 %v1100, 1.0
  %v1126 = vadd.f32 %v1102, 1.0
  %v1127 = vadd.f32 %v1104, 1.0
  %v1128 = vadd.f32 %v1106, 1.0
  %v1129 = vadd.f32 %v1108, 1.0
  %v1130 = vadd.f32 %v1110, 1.0
  %v1131 = vadd.f32 %v1112, 1.0
  %v1132 = vadd.f32 %v1114, 1.0
  %v1133 = vadd.f32 %v1116, 1.0
  %v1134 = vadd.f32 %v1118, 1.0
  %v1135 = vrcp.pop %v1119
  %v1136 = vrcp.pop %v1120
  %v1137 = vrcp.pop %v1121
  %v1138 = vrcp.pop %v1122
  %v1139 = vrcp.pop %v1123
  %v1140 = vrcp.pop %v1124
  %v1141 = vrcp.pop %v1125
  %v1142 = vrcp.pop %v1126
  %v1143 = vrcp.pop %v1127
  %v1144 = vrcp.pop %v1128
  %v1145 = vrcp.pop %v1129
  %v1146 = vrcp.pop %v1130
  %v1147 = vrcp.pop %v1131
  %v1148 = vrcp.pop %v1132
  %v1149 = vrcp.pop %v1133
  %v1150 = vrcp.pop %v1134
  %1152 = vset.pattern.permute.xlu0 16
  %1153 = vperm.xlu0 %1152, %v1135
  %v1154 = vpop.permute.xlu0 %1153
  %1157 = vset.pattern.permute.xlu0 16
  %1158 = vperm.xlu0 %1157, %v1136
  %v1159 = vpop.permute.xlu0 %1158
  %1162 = vset.pattern.permute.xlu0 16
  %1163 = vperm.xlu0 %1162, %v1137
  %v1164 = vpop.permute.xlu0 %1163
  %1167 = vset.pattern.permute.xlu0 16
  %1168 = vperm.xlu0 %1167, %v1138
  %v1169 = vpop.permute.xlu0 %1168
  %1172 = vset.pattern.permute.xlu0 16
  %1173 = vperm.xlu0 %1172, %v1139
  %v1174 = vpop.permute.xlu0 %1173
  %1177 = vset.pattern.permute.xlu0 16
  %1178 = vperm.xlu0 %1177, %v1140
  %v1179 = vpop.permute.xlu0 %1178
  %1182 = vset.pattern.permute.xlu0 16
  %1183 = vperm.xlu0 %1182, %v1141
  %v1184 = vpop.permute.xlu0 %1183
  %1187 = vset.pattern.permute.xlu0 16
  %1188 = vperm.xlu0 %1187, %v1142
  %v1189 = vpop.permute.xlu0 %1188
  %1192 = vset.pattern.permute.xlu0 16
  %1193 = vperm.xlu0 %1192, %v1143
  %v1194 = vpop.permute.xlu0 %1193
  %1197 = vset.pattern.permute.xlu0 16
  %1198 = vperm.xlu0 %1197, %v1144
  %v1199 = vpop.permute.xlu0 %1198
  %1202 = vset.pattern.permute.xlu0 16
  %1203 = vperm.xlu0 %1202, %v1145
  %v1204 = vpop.permute.xlu0 %1203
  %1207 = vset.pattern.permute.xlu0 16
  %1208 = vperm.xlu0 %1207, %v1146
  %v1209 = vpop.permute.xlu0 %1208
  %1212 = vset.pattern.permute.xlu0 16
  %1213 = vperm.xlu0 %1212, %v1147
  %v1214 = vpop.permute.xlu0 %1213
  %1217 = vset.pattern.permute.xlu0 16
  %1218 = vperm.xlu0 %1217, %v1148
  %v1219 = vpop.permute.xlu0 %1218
  %1222 = vset.pattern.permute.xlu0 16
  %1223 = vperm.xlu0 %1222, %v1149
  %v1224 = vpop.permute.xlu0 %1223
  %1227 = vset.pattern.permute.xlu0 16
  %1228 = vperm.xlu0 %1227, %v1150
  %v1229 = vpop.permute.xlu0 %1228
  %v1231 = vmul.f32 %v664, %v1154
  %v1232 = vmul.f32 %v665, %v1154
  %v1233 = vmul.f32 %v666, %v1159
  %v1234 = vmul.f32 %v667, %v1159
  %v1235 = vmul.f32 %v668, %v1164
  %v1236 = vmul.f32 %v669, %v1164
  %v1237 = vmul.f32 %v670, %v1169
  %v1238 = vmul.f32 %v671, %v1169
  %v1239 = vmul.f32 %v672, %v1174
  %v1240 = vmul.f32 %v673, %v1174
  %v1241 = vmul.f32 %v674, %v1179
  %v1242 = vmul.f32 %v675, %v1179
  %v1243 = vmul.f32 %v676, %v1184
  %v1244 = vmul.f32 %v677, %v1184
  %v1245 = vmul.f32 %v678, %v1189
  %v1246 = vmul.f32 %v679, %v1189
  %v1247 = vmul.f32 %v680, %v1194
  %v1248 = vmul.f32 %v681, %v1194
  %v1249 = vmul.f32 %v682, %v1199
  %v1250 = vmul.f32 %v683, %v1199
  %v1251 = vmul.f32 %v684, %v1204
  %v1252 = vmul.f32 %v685, %v1204
  %v1253 = vmul.f32 %v686, %v1209
  %v1254 = vmul.f32 %v687, %v1209
  %v1255 = vmul.f32 %v688, %v1214
  %v1256 = vmul.f32 %v689, %v1214
  %v1257 = vmul.f32 %v690, %v1219
  %v1258 = vmul.f32 %v691, %v1219
  %v1259 = vmul.f32 %v692, %v1224
  %v1260 = vmul.f32 %v693, %v1224
  %v1261 = vmul.f32 %v694, %v1229
  %v1262 = vmul.f32 %v695, %v1229
  %s1263 = scalar_lea.vmem %s3, 256
  %1264 = vst [vmem:[%s1263] sm:$0xff] %v1231
  %1265 = vst [vmem:[%s1263 + $0x8] sm:$0xff] %v1232
  %1266 = vst [vmem:[%s1263 + $0x10] sm:$0xff] %v1233
  %1267 = vst [vmem:[%s1263 + $0x18] sm:$0xff] %v1234
  %1268 = vst [vmem:[%s1263 + $0x20] sm:$0xff] %v1235
  %1269 = vst [vmem:[%s1263 + $0x28] sm:$0xff] %v1236
  %1270 = vst [vmem:[%s1263 + $0x30] sm:$0xff] %v1237
  %1271 = vst [vmem:[%s1263 + $0x38] sm:$0xff] %v1238
  %1272 = vst [vmem:[%s1263 + $0x40] sm:$0xff] %v1239
  %1273 = vst [vmem:[%s1263 + $0x48] sm:$0xff] %v1240
  %1274 = vst [vmem:[%s1263 + $0x50] sm:$0xff] %v1241
  %1275 = vst [vmem:[%s1263 + $0x58] sm:$0xff] %v1242
  %1276 = vst [vmem:[%s1263 + $0x60] sm:$0xff] %v1243
  %1277 = vst [vmem:[%s1263 + $0x68] sm:$0xff] %v1244
  %1278 = vst [vmem:[%s1263 + $0x70] sm:$0xff] %v1245
  %1279 = vst [vmem:[%s1263 + $0x78] sm:$0xff] %v1246
  %1280 = vst [vmem:[%s1263 + $0x80] sm:$0xff] %v1247
  %1281 = vst [vmem:[%s1263 + $0x88] sm:$0xff] %v1248
  %1282 = vst [vmem:[%s1263 + $0x90] sm:$0xff] %v1249
  %1283 = vst [vmem:[%s1263 + $0x98] sm:$0xff] %v1250
  %1284 = vst [vmem:[%s1263 + $0xa0] sm:$0xff] %v1251
  %1285 = vst [vmem:[%s1263 + $0xa8] sm:$0xff] %v1252
  %1286 = vst [vmem:[%s1263 + $0xb0] sm:$0xff] %v1253
  %1287 = vst [vmem:[%s1263 + $0xb8] sm:$0xff] %v1254
  %1288 = vst [vmem:[%s1263 + $0xc0] sm:$0xff] %v1255
  %1289 = vst [vmem:[%s1263 + $0xc8] sm:$0xff] %v1256
  %1290 = vst [vmem:[%s1263 + $0xd0] sm:$0xff] %v1257
  %1291 = vst [vmem:[%s1263 + $0xd8] sm:$0xff] %v1258
  %1292 = vst [vmem:[%s1263 + $0xe0] sm:$0xff] %v1259
  %1293 = vst [vmem:[%s1263 + $0xe8] sm:$0xff] %v1260
  %1294 = vst [vmem:[%s1263 + $0xf0] sm:$0xff] %v1261
  %1295 = vst [vmem:[%s1263 + $0xf8] sm:$0xff] %v1262
  // Predicated region
  $region14: #{ca_forward.1} parent=0 // pred_check
    _
  $region15: #{ca_forward.1} parent=0 // pred_check_branch
    %1297 = sbr.rel (0) target = $region17
  $region16: #{ca_forward.1} parent=0 // pred_region
    _
  $region17: #{ca_forward.1} parent=0 // pred_fallthru
    _
  // Predicated region
  $region18: #{ca_forward.1} parent=0 // pred_check
    _
  $region19: #{ca_forward.1} parent=0 // pred_check_branch
    %1299 = sbr.rel (0) target = $region21
  $region20: #{ca_forward.1} parent=0 // pred_region
    _
  $region21: #{ca_forward.1} parent=0 // pred_fallthru
    _

</llo_original>
